<compile_context>
chip_gen: v6e
topology: v6e:2x2x1
jax: 0.10.0
libtpu: 0.0.40
codegen_flags: <defaults>
</compile_context>

<pallas_src>
import jax
import jax.numpy as jnp
from jax.experimental import pallas as pl
from jax.experimental.pallas import tpu as pltpu

_SMALL_N = 65536                       # below this, launch overhead dominates
_TARGET_BLOCK_BYTES = 8 * 1024 * 1024  # ~8 MiB per block per buffer
_VMEM_LIMIT_BYTES = 48 * 1024 * 1024   # 2 arrays x 2 buffers x 8 MiB + headroom


def _relu_kernel(x_ref, o_ref):
    # relu(x) = max(x, 0): one VPU op per vreg; matches torch-style relu.
    o_ref[...] = jnp.maximum(x_ref[...], 0)


def _cdiv(a: int, b: int) -> int:
    return -(-a // b)


def _pick_tile_rows(rows: int, cols: int, itemsize: int) -> int:
    """Dtype-aware row tile targeting ~_TARGET_BLOCK_BYTES per block."""
    # Sublane packing: f32 -> 8, bf16/f16 -> 16, int8/fp8 -> 32.
    sublane = max(8, 32 // max(itemsize, 1))
    block_rows = (_TARGET_BLOCK_BYTES // (cols * itemsize)) // sublane * sublane
    block_rows = max(sublane, block_rows)
    if rows <= block_rows:
        # Single block covering the full row extent (always a legal shape).
        return rows
    # Multiple of the packing factor; ragged last block handled by Pallas
    # masking (OOB reads padded, OOB writes dropped) - safe for elementwise.
    return block_rows


def _relu_2d(x2: jax.Array, tile_r: int, cols: int) -> jax.Array:
    rows = x2.shape[0]
    itemsize = jnp.dtype(x2.dtype).itemsize
    n_bytes = rows * cols * itemsize
    return pl.pallas_call(
        _relu_kernel,
        out_shape=jax.ShapeDtypeStruct((rows, cols), x2.dtype),
        grid_spec=pltpu.PrefetchScalarGridSpec(
            num_scalar_prefetch=0,
            grid=(_cdiv(rows, tile_r),),
            in_specs=[pl.BlockSpec((tile_r, cols), lambda i: (i, 0))],
            out_specs=pl.BlockSpec((tile_r, cols), lambda i: (i, 0)),
        ),
        compiler_params=pltpu.CompilerParams(
            dimension_semantics=("parallel",),
            vmem_limit_bytes=_VMEM_LIMIT_BYTES,
        ),
        cost_estimate=pl.CostEstimate(
            flops=rows * cols,
            transcendentals=0,
            bytes_accessed=2 * n_bytes,
        ),
    )(x2)


def relu_pallas(x: jax.Array) -> jax.Array:
    """Elementwise ReLU for any input shape; hot path runs in a Pallas kernel."""
    orig_shape = x.shape
    n = 1
    for d in orig_shape:
        n *= int(d)
    if n == 0:
        return x

    # Tiny tensors: kernel launch + pipeline prologue dominates; plain VPU op.
    if n < _SMALL_N:
        return jnp.maximum(x, 0)

    flat = x.reshape(-1)
    itemsize = jnp.dtype(x.dtype).itemsize

    # Lane-dense column width: largest multiple of 128 (<= 512) dividing n,
    # so the 2D reshape is free (no pad, no trailing slice).
    cols = None
    for c in (512, 256, 128):
        if n % c == 0:
            cols = c
            break

    if cols is not None:
        rows = n // cols
        tile_r = _pick_tile_rows(rows, cols, itemsize)
        out = _relu_2d(flat.reshape(rows, cols), tile_r, cols)
        return out.reshape(orig_shape)

    # Truly ragged n (not a multiple of 128): run the kernel on the n//512
    # full rows and handle the <512-element tail with a tiny separate op —
    # no full-array pad or slice round trip through HBM.
    cols = 512
    n_main = (n // cols) * cols
    rows = n_main // cols
    tile_r = _pick_tile_rows(rows, cols, itemsize)
    out_main = _relu_2d(flat[:n_main].reshape(rows, cols), tile_r, cols)
    out_tail = jnp.maximum(flat[n_main:], 0)
    return jnp.concatenate([out_main.reshape(-1), out_tail]).reshape(orig_shape)


if __name__ == "__main__":
    key = jax.random.PRNGKey(0)
    k1, k2, k3, k4, k5 = jax.random.split(key, 5)

    def ref_relu(v):
        # Reference matching the PyTorch module: x * (x > 0)
        return v * (v > 0).astype(v.dtype)

    # 1) Small NCHW-style activation consistent with typical module usage
    #    (takes the small-input fast path).
    x1 = jax.random.normal(k1, (2, 4, 16, 16), dtype=jnp.float32)
    y1 = relu_pallas(x1)
    jax.block_until_ready(y1)
    assert y1.shape == x1.shape and y1.dtype == x1.dtype
    assert jnp.allclose(y1, ref_relu(x1)), "mismatch (small NCHW fast path)"

    # 2) Kernel path, single block, n % 512 == 0 (no pad / no slice).
    x2 = jax.random.normal(k2, (8, 32, 32, 32), dtype=jnp.float32)
    y2 = relu_pallas(x2)
    jax.block_until_ready(y2)
    assert jnp.allclose(y2, ref_relu(x2)), "mismatch (single-block kernel path)"

    # 3) Kernel path, grid > 1 with a ragged last row-block (8 MiB tiles).
    x3 = jax.random.normal(k3, ((4096 + 8) * 512,), dtype=jnp.float32)
    y3 = relu_pallas(x3)
    jax.block_until_ready(y3)
    assert jnp.allclose(y3, ref_relu(x3)), "mismatch (multi-block ragged rows)"

    # 4) n divisible by 128 but not 256/512 -> cols=128 branch, still no pad.
    x4 = jax.random.normal(k4, (1201 * 128,), dtype=jnp.float32)
    y4 = relu_pallas(x4)
    jax.block_until_ready(y4)
    assert jnp.allclose(y4, ref_relu(x4)), "mismatch (cols=128 branch)"

    # 5) Truly ragged n (not a multiple of 128): main kernel + tiny tail op.
    x5 = jax.random.normal(k5, (200003,), dtype=jnp.float32)
    y5 = relu_pallas(x5)
    jax.block_until_ready(y5)
    assert y5.shape == x5.shape
    assert jnp.allclose(y5, ref_relu(x5)), "mismatch (ragged main+tail path)"

    # 6) bf16 through the kernel (dtype-scaled block rows).
    x6 = jax.random.normal(k1, (512, 512), dtype=jnp.bfloat16)
    y6 = relu_pallas(x6)
    jax.block_until_ready(y6)
    assert y6.dtype == jnp.bfloat16
    assert jnp.allclose(y6.astype(jnp.float32),
                        ref_relu(x6).astype(jnp.float32)), "mismatch (bf16)"

    print("KERNEL_OK")
</pallas_src>

<mosaic_0001>
module attributes {stable_mosaic.version = 11 : i64} {
  func.func @_relu_kernel(%arg0: i32, %arg1: memref<512x512xf32, #tpu.memory_space<vmem>>, %arg2: memref<512x512xf32, #tpu.memory_space<vmem>>) attributes {dimension_semantics = [#tpu.dimension_semantics<parallel>], iteration_bounds = array<i64: 1>, scalar_prefetch = 0 : i64, scratch_operands = 0 : i64, tpu.core_type = #tpu.core_type<tc>, window_params = [{transform_indices = @transform_0, window_bounds = array<i64: 512, 512>}, {transform_indices = @transform_1, window_bounds = array<i64: 512, 512>}]} {
    %c0 = arith.constant 0 : index
    %c0_0 = arith.constant 0 : index
    %0 = vector.load %arg1[%c0, %c0_0] : memref<512x512xf32, #tpu.memory_space<vmem>>, vector<512x512xf32>
    %cst = arith.constant 0.000000e+00 : f32
    %1 = vector.broadcast %cst : f32 to vector<512x512xf32>
    %2 = arith.maximumf %0, %1 : vector<512x512xf32>
    %c0_1 = arith.constant 0 : index
    %c0_2 = arith.constant 0 : index
    %3 = vector.load %arg2[%c0_1, %c0_2] : memref<512x512xf32, #tpu.memory_space<vmem>>, vector<512x512xf32>
    tpu.vector_store %arg2[%c0_1, %c0_2], %2 {strides = array<i32>} : memref<512x512xf32, #tpu.memory_space<vmem>>, vector<512x512xf32>,
    return
  }
  func.func @transform_0(%arg0: i32) -> (i32, i32) {
    %c0_i32 = arith.constant 0 : i32
    %c0_i32_0 = arith.constant 0 : i32
    return %arg0, %c0_i32 : i32, i32
  }
  func.func @transform_1(%arg0: i32) -> (i32, i32) {
    %c0_i32 = arith.constant 0 : i32
    %c0_i32_0 = arith.constant 0 : i32
    return %arg0, %c0_i32 : i32, i32
  }
}

</mosaic_0001>

<llo_original>
// kernel: tpu_custom_call.1
$region0: #{tpu_custom_call.1}
  #allocation0 [shape = 'u32[]', space=smem, size = 0x4, offset = 0x4, fixed_abs, tag = 'smem constant byte address 0x4 - core index']
  #allocation1 [shape = 'u32[144,128]{1,0:T(1,128)}', space=vmem, size = 0x12000, scoped, tag = 'internal scratch']
  %s0 = inlined_call_operand.hbm [shape: f32[512,512], index: 0, kind: input, shape index: {}]
  %s1 = inlined_call_operand.hbm [shape: f32[512,512], index: 1, kind: output, shape index: {}]
  %s2 = sld [smem:[#allocation0]]
  $region18: #{tpu_custom_call.1} parent=0
    _
  %s4 = ssub.s32 1, %s2
  %s5 = scalar_select 0, %s4, %s2
  $region1: #{tpu_custom_call.1} parent=0
    #allocation2 [shape = 'u8[1048576]{0}', space=vmem, size = 0x100000, scoped, tag = 'input window, operand 0, single buffered']
    #allocation3 [shape = 's32[1]{0}', space=sflag, size = 0x4, scoped, tag = 'scoped memory for tpu_custom_call.1']
    #allocation4 [shape = 's32[1]{0}', space=sflag, size = 0x4, scoped, tag = 'scoped memory for tpu_custom_call.1']
    #allocation5 [shape = 'u8[1048576]{0}', space=vmem, size = 0x100000, scoped, tag = 'output window, operand 0, single buffered']
    %6 = vsyncpa [#allocation3], 0
    %7 = vsyncpa [#allocation4], 0
    // Predicated region
    $region2: #{tpu_custom_call.1} parent=1 // pred_check
      _
    $region3: #{tpu_custom_call.1} parent=1 // pred_check_branch
      %9 = sbr.rel (0) target = $region5
    $region4: #{tpu_custom_call.1} parent=1 // pred_region
      %s11 = ssub.s32 32768, 32768
      %12 = vsyncadd [#allocation3], %s11
      %s13 = sshll.u32 [#allocation2], 4
      %s14 = int_to_ptr.vmem [resolvable:$true] %s13
      %19 = dma.hbm_to_vmem [thread:$0]  %s0, 32768, %s14, [#allocation3], 512, 512, 32
    $region5: #{tpu_custom_call.1} parent=1 // pred_fallthru
      _
    // Predicated region
    $region6: #{tpu_custom_call.1} parent=1 // pred_check
      _
    $region7: #{tpu_custom_call.1} parent=1 // pred_check_branch
      %21 = sbr.rel (0) target = $region9
    $region8: #{tpu_custom_call.1} parent=1 // pred_region
      %22 = dma.done [#allocation3], 32768
    $region9: #{tpu_custom_call.1} parent=1 // pred_fallthru
      _
    %v23 = vld [vmem:[#allocation2] sm:$0xff]
    %v24 = vld [vmem:[#allocation2 + $0x8] sm:$0xff]
    %v25 = vld [vmem:[#allocation2 + $0x10] sm:$0xff]
    %v26 = vld [vmem:[#allocation2 + $0x18] sm:$0xff]
    %v27 = vld [vmem:[#allocation2 + $0x20] sm:$0xff]
    %v28 = vld [vmem:[#allocation2 + $0x28] sm:$0xff]
    %v29 = vld [vmem:[#allocation2 + $0x30] sm:$0xff]
    %v30 = vld [vmem:[#allocation2 + $0x38] sm:$0xff]
    %v31 = vld [vmem:[#allocation2 + $0x40] sm:$0xff]
    %v32 = vld [vmem:[#allocation2 + $0x48] sm:$0xff]
    %v33 = vld [vmem:[#allocation2 + $0x50] sm:$0xff]
    %v34 = vld [vmem:[#allocation2 + $0x58] sm:$0xff]
    %v35 = vld [vmem:[#allocation2 + $0x60] sm:$0xff]
    %v36 = vld [vmem:[#allocation2 + $0x68] sm:$0xff]
    %v37 = vld [vmem:[#allocation2 + $0x70] sm:$0xff]
    %v38 = vld [vmem:[#allocation2 + $0x78] sm:$0xff]
    %v39 = vld [vmem:[#allocation2 + $0x80] sm:$0xff]
    %v40 = vld [vmem:[#allocation2 + $0x88] sm:$0xff]
    %v41 = vld [vmem:[#allocation2 + $0x90] sm:$0xff]
    %v42 = vld [vmem:[#allocation2 + $0x98] sm:$0xff]
    %v43 = vld [vmem:[#allocation2 + $0xa0] sm:$0xff]
    %v44 = vld [vmem:[#allocation2 + $0xa8] sm:$0xff]
    %v45 = vld [vmem:[#allocation2 + $0xb0] sm:$0xff]
    %v46 = vld [vmem:[#allocation2 + $0xb8] sm:$0xff]
    %v47 = vld [vmem:[#allocation2 + $0xc0] sm:$0xff]
    %v48 = vld [vmem:[#allocation2 + $0xc8] sm:$0xff]
    %v49 = vld [vmem:[#allocation2 + $0xd0] sm:$0xff]
    %v50 = vld [vmem:[#allocation2 + $0xd8] sm:$0xff]
    %v51 = vld [vmem:[#allocation2 + $0xe0] sm:$0xff]
    %v52 = vld [vmem:[#allocation2 + $0xe8] sm:$0xff]
    %v53 = vld [vmem:[#allocation2 + $0xf0] sm:$0xff]
    %v54 = vld [vmem:[#allocation2 + $0xf8] sm:$0xff]
    %v55 = vld [vmem:[#allocation2 + $0x100] sm:$0xff]
    %v56 = vld [vmem:[#allocation2 + $0x108] sm:$0xff]
    %v57 = vld [vmem:[#allocation2 + $0x110] sm:$0xff]
    %v58 = vld [vmem:[#allocation2 + $0x118] sm:$0xff]
    %v59 = vld [vmem:[#allocation2 + $0x120] sm:$0xff]
    %v60 = vld [vmem:[#allocation2 + $0x128] sm:$0xff]
    %v61 = vld [vmem:[#allocation2 + $0x130] sm:$0xff]
    %v62 = vld [vmem:[#allocation2 + $0x138] sm:$0xff]
    %v63 = vld [vmem:[#allocation2 + $0x140] sm:$0xff]
    %v64 = vld [vmem:[#allocation2 + $0x148] sm:$0xff]
    %v65 = vld [vmem:[#allocation2 + $0x150] sm:$0xff]
    %v66 = vld [vmem:[#allocation2 + $0x158] sm:$0xff]
    %v67 = vld [vmem:[#allocation2 + $0x160] sm:$0xff]
    %v68 = vld [vmem:[#allocation2 + $0x168] sm:$0xff]
    %v69 = vld [vmem:[#allocation2 + $0x170] sm:$0xff]
    %v70 = vld [vmem:[#allocation2 + $0x178] sm:$0xff]
    %v71 = vld [vmem:[#allocation2 + $0x180] sm:$0xff]
    %v72 = vld [vmem:[#allocation2 + $0x188] sm:$0xff]
    %v73 = vld [vmem:[#allocation2 + $0x190] sm:$0xff]
    %v74 = vld [vmem:[#allocation2 + $0x198] sm:$0xff]
    %v75 = vld [vmem:[#allocation2 + $0x1a0] sm:$0xff]
    %v76 = vld [vmem:[#allocation2 + $0x1a8] sm:$0xff]
    %v77 = vld [vmem:[#allocation2 + $0x1b0] sm:$0xff]
    %v78 = vld [vmem:[#allocation2 + $0x1b8] sm:$0xff]
    %v79 = vld [vmem:[#allocation2 + $0x1c0] sm:$0xff]
    %v80 = vld [vmem:[#allocation2 + $0x1c8] sm:$0xff]
    %v81 = vld [vmem:[#allocation2 + $0x1d0] sm:$0xff]
    %v82 = vld [vmem:[#allocation2 + $0x1d8] sm:$0xff]
    %v83 = vld [vmem:[#allocation2 + $0x1e0] sm:$0xff]
    %v84 = vld [vmem:[#allocation2 + $0x1e8] sm:$0xff]
    %v85 = vld [vmem:[#allocation2 + $0x1f0] sm:$0xff]
    %v86 = vld [vmem:[#allocation2 + $0x1f8] sm:$0xff]
    %v87 = vld [vmem:[#allocation2 + $0x200] sm:$0xff]
    %v88 = vld [vmem:[#allocation2 + $0x208] sm:$0xff]
    %v89 = vld [vmem:[#allocation2 + $0x210] sm:$0xff]
    %v90 = vld [vmem:[#allocation2 + $0x218] sm:$0xff]
    %v91 = vld [vmem:[#allocation2 + $0x220] sm:$0xff]
    %v92 = vld [vmem:[#allocation2 + $0x228] sm:$0xff]
    %v93 = vld [vmem:[#allocation2 + $0x230] sm:$0xff]
    %v94 = vld [vmem:[#allocation2 + $0x238] sm:$0xff]
    %v95 = vld [vmem:[#allocation2 + $0x240] sm:$0xff]
    %v96 = vld [vmem:[#allocation2 + $0x248] sm:$0xff]
    %v97 = vld [vmem:[#allocation2 + $0x250] sm:$0xff]
    %v98 = vld [vmem:[#allocation2 + $0x258] sm:$0xff]
    %v99 = vld [vmem:[#allocation2 + $0x260] sm:$0xff]
    %v100 = vld [vmem:[#allocation2 + $0x268] sm:$0xff]
    %v101 = vld [vmem:[#allocation2 + $0x270] sm:$0xff]
    %v102 = vld [vmem:[#allocation2 + $0x278] sm:$0xff]
    %v103 = vld [vmem:[#allocation2 + $0x280] sm:$0xff]
    %v104 = vld [vmem:[#allocation2 + $0x288] sm:$0xff]
    %v105 = vld [vmem:[#allocation2 + $0x290] sm:$0xff]
    %v106 = vld [vmem:[#allocation2 + $0x298] sm:$0xff]
    %v107 = vld [vmem:[#allocation2 + $0x2a0] sm:$0xff]
    %v108 = vld [vmem:[#allocation2 + $0x2a8] sm:$0xff]
    %v109 = vld [vmem:[#allocation2 + $0x2b0] sm:$0xff]
    %v110 = vld [vmem:[#allocation2 + $0x2b8] sm:$0xff]
    %v111 = vld [vmem:[#allocation2 + $0x2c0] sm:$0xff]
    %v112 = vld [vmem:[#allocation2 + $0x2c8] sm:$0xff]
    %v113 = vld [vmem:[#allocation2 + $0x2d0] sm:$0xff]
    %v114 = vld [vmem:[#allocation2 + $0x2d8] sm:$0xff]
    %v115 = vld [vmem:[#allocation2 + $0x2e0] sm:$0xff]
    %v116 = vld [vmem:[#allocation2 + $0x2e8] sm:$0xff]
    %v117 = vld [vmem:[#allocation2 + $0x2f0] sm:$0xff]
    %v118 = vld [vmem:[#allocation2 + $0x2f8] sm:$0xff]
    %v119 = vld [vmem:[#allocation2 + $0x300] sm:$0xff]
    %v120 = vld [vmem:[#allocation2 + $0x308] sm:$0xff]
    %v121 = vld [vmem:[#allocation2 + $0x310] sm:$0xff]
    %v122 = vld [vmem:[#allocation2 + $0x318] sm:$0xff]
    %v123 = vld [vmem:[#allocation2 + $0x320] sm:$0xff]
    %v124 = vld [vmem:[#allocation2 + $0x328] sm:$0xff]
    %v125 = vld [vmem:[#allocation2 + $0x330] sm:$0xff]
    %v126 = vld [vmem:[#allocation2 + $0x338] sm:$0xff]
    %v127 = vld [vmem:[#allocation2 + $0x340] sm:$0xff]
    %v128 = vld [vmem:[#allocation2 + $0x348] sm:$0xff]
    %v129 = vld [vmem:[#allocation2 + $0x350] sm:$0xff]
    %v130 = vld [vmem:[#allocation2 + $0x358] sm:$0xff]
    %v131 = vld [vmem:[#allocation2 + $0x360] sm:$0xff]
    %v132 = vld [vmem:[#allocation2 + $0x368] sm:$0xff]
    %v133 = vld [vmem:[#allocation2 + $0x370] sm:$0xff]
    %v134 = vld [vmem:[#allocation2 + $0x378] sm:$0xff]
    %v135 = vld [vmem:[#allocation2 + $0x380] sm:$0xff]
    %v136 = vld [vmem:[#allocation2 + $0x388] sm:$0xff]
    %v137 = vld [vmem:[#allocation2 + $0x390] sm:$0xff]
    %v138 = vld [vmem:[#allocation2 + $0x398] sm:$0xff]
    %v139 = vld [vmem:[#allocation2 + $0x3a0] sm:$0xff]
    %v140 = vld [vmem:[#allocation2 + $0x3a8] sm:$0xff]
    %v141 = vld [vmem:[#allocation2 + $0x3b0] sm:$0xff]
    %v142 = vld [vmem:[#allocation2 + $0x3b8] sm:$0xff]
    %v143 = vld [vmem:[#allocation2 + $0x3c0] sm:$0xff]
    %v144 = vld [vmem:[#allocation2 + $0x3c8] sm:$0xff]
    %v145 = vld [vmem:[#allocation2 + $0x3d0] sm:$0xff]
    %v146 = vld [vmem:[#allocation2 + $0x3d8] sm:$0xff]
    %v147 = vld [vmem:[#allocation2 + $0x3e0] sm:$0xff]
    %v148 = vld [vmem:[#allocation2 + $0x3e8] sm:$0xff]
    %v149 = vld [vmem:[#allocation2 + $0x3f0] sm:$0xff]
    %v150 = vld [vmem:[#allocation2 + $0x3f8] sm:$0xff]
    %v151 = vld [vmem:[#allocation2 + $0x400] sm:$0xff]
    %v152 = vld [vmem:[#allocation2 + $0x408] sm:$0xff]
    %v153 = vld [vmem:[#allocation2 + $0x410] sm:$0xff]
    %v154 = vld [vmem:[#allocation2 + $0x418] sm:$0xff]
    %v155 = vld [vmem:[#allocation2 + $0x420] sm:$0xff]
    %v156 = vld [vmem:[#allocation2 + $0x428] sm:$0xff]
    %v157 = vld [vmem:[#allocation2 + $0x430] sm:$0xff]
    %v158 = vld [vmem:[#allocation2 + $0x438] sm:$0xff]
    %v159 = vld [vmem:[#allocation2 + $0x440] sm:$0xff]
    %v160 = vld [vmem:[#allocation2 + $0x448] sm:$0xff]
    %v161 = vld [vmem:[#allocation2 + $0x450] sm:$0xff]
    %v162 = vld [vmem:[#allocation2 + $0x458] sm:$0xff]
    %v163 = vld [vmem:[#allocation2 + $0x460] sm:$0xff]
    %v164 = vld [vmem:[#allocation2 + $0x468] sm:$0xff]
    %v165 = vld [vmem:[#allocation2 + $0x470] sm:$0xff]
    %v166 = vld [vmem:[#allocation2 + $0x478] sm:$0xff]
    %v167 = vld [vmem:[#allocation2 + $0x480] sm:$0xff]
    %v168 = vld [vmem:[#allocation2 + $0x488] sm:$0xff]
    %v169 = vld [vmem:[#allocation2 + $0x490] sm:$0xff]
    %v170 = vld [vmem:[#allocation2 + $0x498] sm:$0xff]
    %v171 = vld [vmem:[#allocation2 + $0x4a0] sm:$0xff]
    %v172 = vld [vmem:[#allocation2 + $0x4a8] sm:$0xff]
    %v173 = vld [vmem:[#allocation2 + $0x4b0] sm:$0xff]
    %v174 = vld [vmem:[#allocation2 + $0x4b8] sm:$0xff]
    %v175 = vld [vmem:[#allocation2 + $0x4c0] sm:$0xff]
    %v176 = vld [vmem:[#allocation2 + $0x4c8] sm:$0xff]
    %v177 = vld [vmem:[#allocation2 + $0x4d0] sm:$0xff]
    %v178 = vld [vmem:[#allocation2 + $0x4d8] sm:$0xff]
    %v179 = vld [vmem:[#allocation2 + $0x4e0] sm:$0xff]
    %v180 = vld [vmem:[#allocation2 + $0x4e8] sm:$0xff]
    %v181 = vld [vmem:[#allocation2 + $0x4f0] sm:$0xff]
    %v182 = vld [vmem:[#allocation2 + $0x4f8] sm:$0xff]
    %v183 = vld [vmem:[#allocation2 + $0x500] sm:$0xff]
    %v184 = vld [vmem:[#allocation2 + $0x508] sm:$0xff]
    %v185 = vld [vmem:[#allocation2 + $0x510] sm:$0xff]
    %v186 = vld [vmem:[#allocation2 + $0x518] sm:$0xff]
    %v187 = vld [vmem:[#allocation2 + $0x520] sm:$0xff]
    %v188 = vld [vmem:[#allocation2 + $0x528] sm:$0xff]
    %v189 = vld [vmem:[#allocation2 + $0x530] sm:$0xff]
    %v190 = vld [vmem:[#allocation2 + $0x538] sm:$0xff]
    %v191 = vld [vmem:[#allocation2 + $0x540] sm:$0xff]
    %v192 = vld [vmem:[#allocation2 + $0x548] sm:$0xff]
    %v193 = vld [vmem:[#allocation2 + $0x550] sm:$0xff]
    %v194 = vld [vmem:[#allocation2 + $0x558] sm:$0xff]
    %v195 = vld [vmem:[#allocation2 + $0x560] sm:$0xff]
    %v196 = vld [vmem:[#allocation2 + $0x568] sm:$0xff]
    %v197 = vld [vmem:[#allocation2 + $0x570] sm:$0xff]
    %v198 = vld [vmem:[#allocation2 + $0x578] sm:$0xff]
    %v199 = vld [vmem:[#allocation2 + $0x580] sm:$0xff]
    %v200 = vld [vmem:[#allocation2 + $0x588] sm:$0xff]
    %v201 = vld [vmem:[#allocation2 + $0x590] sm:$0xff]
    %v202 = vld [vmem:[#allocation2 + $0x598] sm:$0xff]
    %v203 = vld [vmem:[#allocation2 + $0x5a0] sm:$0xff]
    %v204 = vld [vmem:[#allocation2 + $0x5a8] sm:$0xff]
    %v205 = vld [vmem:[#allocation2 + $0x5b0] sm:$0xff]
    %v206 = vld [vmem:[#allocation2 + $0x5b8] sm:$0xff]
    %v207 = vld [vmem:[#allocation2 + $0x5c0] sm:$0xff]
    %v208 = vld [vmem:[#allocation2 + $0x5c8] sm:$0xff]
    %v209 = vld [vmem:[#allocation2 + $0x5d0] sm:$0xff]
    %v210 = vld [vmem:[#allocation2 + $0x5d8] sm:$0xff]
    %v211 = vld [vmem:[#allocation2 + $0x5e0] sm:$0xff]
    %v212 = vld [vmem:[#allocation2 + $0x5e8] sm:$0xff]
    %v213 = vld [vmem:[#allocation2 + $0x5f0] sm:$0xff]
    %v214 = vld [vmem:[#allocation2 + $0x5f8] sm:$0xff]
    %v215 = vld [vmem:[#allocation2 + $0x600] sm:$0xff]
    %v216 = vld [vmem:[#allocation2 + $0x608] sm:$0xff]
    %v217 = vld [vmem:[#allocation2 + $0x610] sm:$0xff]
    %v218 = vld [vmem:[#allocation2 + $0x618] sm:$0xff]
    %v219 = vld [vmem:[#allocation2 + $0x620] sm:$0xff]
    %v220 = vld [vmem:[#allocation2 + $0x628] sm:$0xff]
    %v221 = vld [vmem:[#allocation2 + $0x630] sm:$0xff]
    %v222 = vld [vmem:[#allocation2 + $0x638] sm:$0xff]
    %v223 = vld [vmem:[#allocation2 + $0x640] sm:$0xff]
    %v224 = vld [vmem:[#allocation2 + $0x648] sm:$0xff]
    %v225 = vld [vmem:[#allocation2 + $0x650] sm:$0xff]
    %v226 = vld [vmem:[#allocation2 + $0x658] sm:$0xff]
    %v227 = vld [vmem:[#allocation2 + $0x660] sm:$0xff]
    %v228 = vld [vmem:[#allocation2 + $0x668] sm:$0xff]
    %v229 = vld [vmem:[#allocation2 + $0x670] sm:$0xff]
    %v230 = vld [vmem:[#allocation2 + $0x678] sm:$0xff]
    %v231 = vld [vmem:[#allocation2 + $0x680] sm:$0xff]
    %v232 = vld [vmem:[#allocation2 + $0x688] sm:$0xff]
    %v233 = vld [vmem:[#allocation2 + $0x690] sm:$0xff]
    %v234 = vld [vmem:[#allocation2 + $0x698] sm:$0xff]
    %v235 = vld [vmem:[#allocation2 + $0x6a0] sm:$0xff]
    %v236 = vld [vmem:[#allocation2 + $0x6a8] sm:$0xff]
    %v237 = vld [vmem:[#allocation2 + $0x6b0] sm:$0xff]
    %v238 = vld [vmem:[#allocation2 + $0x6b8] sm:$0xff]
    %v239 = vld [vmem:[#allocation2 + $0x6c0] sm:$0xff]
    %v240 = vld [vmem:[#allocation2 + $0x6c8] sm:$0xff]
    %v241 = vld [vmem:[#allocation2 + $0x6d0] sm:$0xff]
    %v242 = vld [vmem:[#allocation2 + $0x6d8] sm:$0xff]
    %v243 = vld [vmem:[#allocation2 + $0x6e0] sm:$0xff]
    %v244 = vld [vmem:[#allocation2 + $0x6e8] sm:$0xff]
    %v245 = vld [vmem:[#allocation2 + $0x6f0] sm:$0xff]
    %v246 = vld [vmem:[#allocation2 + $0x6f8] sm:$0xff]
    %v247 = vld [vmem:[#allocation2 + $0x700] sm:$0xff]
    %v248 = vld [vmem:[#allocation2 + $0x708] sm:$0xff]
    %v249 = vld [vmem:[#allocation2 + $0x710] sm:$0xff]
    %v250 = vld [vmem:[#allocation2 + $0x718] sm:$0xff]
    %v251 = vld [vmem:[#allocation2 + $0x720] sm:$0xff]
    %v252 = vld [vmem:[#allocation2 + $0x728] sm:$0xff]
    %v253 = vld [vmem:[#allocation2 + $0x730] sm:$0xff]
    %v254 = vld [vmem:[#allocation2 + $0x738] sm:$0xff]
    %v255 = vld [vmem:[#allocation2 + $0x740] sm:$0xff]
    %v256 = vld [vmem:[#allocation2 + $0x748] sm:$0xff]
    %v257 = vld [vmem:[#allocation2 + $0x750] sm:$0xff]
    %v258 = vld [vmem:[#allocation2 + $0x758] sm:$0xff]
    %v259 = vld [vmem:[#allocation2 + $0x760] sm:$0xff]
    %v260 = vld [vmem:[#allocation2 + $0x768] sm:$0xff]
    %v261 = vld [vmem:[#allocation2 + $0x770] sm:$0xff]
    %v262 = vld [vmem:[#allocation2 + $0x778] sm:$0xff]
    %v263 = vld [vmem:[#allocation2 + $0x780] sm:$0xff]
    %v264 = vld [vmem:[#allocation2 + $0x788] sm:$0xff]
    %v265 = vld [vmem:[#allocation2 + $0x790] sm:$0xff]
    %v266 = vld [vmem:[#allocation2 + $0x798] sm:$0xff]
    %v267 = vld [vmem:[#allocation2 + $0x7a0] sm:$0xff]
    %v268 = vld [vmem:[#allocation2 + $0x7a8] sm:$0xff]
    %v269 = vld [vmem:[#allocation2 + $0x7b0] sm:$0xff]
    %v270 = vld [vmem:[#allocation2 + $0x7b8] sm:$0xff]
    %v271 = vld [vmem:[#allocation2 + $0x7c0] sm:$0xff]
    %v272 = vld [vmem:[#allocation2 + $0x7c8] sm:$0xff]
    %v273 = vld [vmem:[#allocation2 + $0x7d0] sm:$0xff]
    %v274 = vld [vmem:[#allocation2 + $0x7d8] sm:$0xff]
    %v275 = vld [vmem:[#allocation2 + $0x7e0] sm:$0xff]
    %v276 = vld [vmem:[#allocation2 + $0x7e8] sm:$0xff]
    %v277 = vld [vmem:[#allocation2 + $0x7f0] sm:$0xff]
    %v278 = vld [vmem:[#allocation2 + $0x7f8] sm:$0xff]
    %v279 = vmax.f32 %v23, 0.0
    %v280 = vmax.f32 %v24, 0.0
    %v281 = vmax.f32 %v25, 0.0
    %v282 = vmax.f32 %v26, 0.0
    %v283 = vmax.f32 %v27, 0.0
    %v284 = vmax.f32 %v28, 0.0
    %v285 = vmax.f32 %v29, 0.0
    %v286 = vmax.f32 %v30, 0.0
    %v287 = vmax.f32 %v31, 0.0
    %v288 = vmax.f32 %v32, 0.0
    %v289 = vmax.f32 %v33, 0.0
    %v290 = vmax.f32 %v34, 0.0
    %v291 = vmax.f32 %v35, 0.0
    %v292 = vmax.f32 %v36, 0.0
    %v293 = vmax.f32 %v37, 0.0
    %v294 = vmax.f32 %v38, 0.0
    %v295 = vmax.f32 %v39, 0.0
    %v296 = vmax.f32 %v40, 0.0
    %v297 = vmax.f32 %v41, 0.0
    %v298 = vmax.f32 %v42, 0.0
    %v299 = vmax.f32 %v43, 0.0
    %v300 = vmax.f32 %v44, 0.0
    %v301 = vmax.f32 %v45, 0.0
    %v302 = vmax.f32 %v46, 0.0
    %v303 = vmax.f32 %v47, 0.0
    %v304 = vmax.f32 %v48, 0.0
    %v305 = vmax.f32 %v49, 0.0
    %v306 = vmax.f32 %v50, 0.0
    %v307 = vmax.f32 %v51, 0.0
    %v308 = vmax.f32 %v52, 0.0
    %v309 = vmax.f32 %v53, 0.0
    %v310 = vmax.f32 %v54, 0.0
    %v311 = vmax.f32 %v55, 0.0
    %v312 = vmax.f32 %v56, 0.0
    %v313 = vmax.f32 %v57, 0.0
    %v314 = vmax.f32 %v58, 0.0
    %v315 = vmax.f32 %v59, 0.0
    %v316 = vmax.f32 %v60, 0.0
    %v317 = vmax.f32 %v61, 0.0
    %v318 = vmax.f32 %v62, 0.0
    %v319 = vmax.f32 %v63, 0.0
    %v320 = vmax.f32 %v64, 0.0
    %v321 = vmax.f32 %v65, 0.0
    %v322 = vmax.f32 %v66, 0.0
    %v323 = vmax.f32 %v67, 0.0
    %v324 = vmax.f32 %v68, 0.0
    %v325 = vmax.f32 %v69, 0.0
    %v326 = vmax.f32 %v70, 0.0
    %v327 = vmax.f32 %v71, 0.0
    %v328 = vmax.f32 %v72, 0.0
    %v329 = vmax.f32 %v73, 0.0
    %v330 = vmax.f32 %v74, 0.0
    %v331 = vmax.f32 %v75, 0.0
    %v332 = vmax.f32 %v76, 0.0
    %v333 = vmax.f32 %v77, 0.0
    %v334 = vmax.f32 %v78, 0.0
    %v335 = vmax.f32 %v79, 0.0
    %v336 = vmax.f32 %v80, 0.0
    %v337 = vmax.f32 %v81, 0.0
    %v338 = vmax.f32 %v82, 0.0
    %v339 = vmax.f32 %v83, 0.0
    %v340 = vmax.f32 %v84, 0.0
    %v341 = vmax.f32 %v85, 0.0
    %v342 = vmax.f32 %v86, 0.0
    %v343 = vmax.f32 %v87, 0.0
    %v344 = vmax.f32 %v88, 0.0
    %v345 = vmax.f32 %v89, 0.0
    %v346 = vmax.f32 %v90, 0.0
    %v347 = vmax.f32 %v91, 0.0
    %v348 = vmax.f32 %v92, 0.0
    %v349 = vmax.f32 %v93, 0.0
    %v350 = vmax.f32 %v94, 0.0
    %v351 = vmax.f32 %v95, 0.0
    %v352 = vmax.f32 %v96, 0.0
    %v353 = vmax.f32 %v97, 0.0
    %v354 = vmax.f32 %v98, 0.0
    %v355 = vmax.f32 %v99, 0.0
    %v356 = vmax.f32 %v100, 0.0
    %v357 = vmax.f32 %v101, 0.0
    %v358 = vmax.f32 %v102, 0.0
    %v359 = vmax.f32 %v103, 0.0
    %v360 = vmax.f32 %v104, 0.0
    %v361 = vmax.f32 %v105, 0.0
    %v362 = vmax.f32 %v106, 0.0
    %v363 = vmax.f32 %v107, 0.0
    %v364 = vmax.f32 %v108, 0.0
    %v365 = vmax.f32 %v109, 0.0
    %v366 = vmax.f32 %v110, 0.0
    %v367 = vmax.f32 %v111, 0.0
    %v368 = vmax.f32 %v112, 0.0
    %v369 = vmax.f32 %v113, 0.0
    %v370 = vmax.f32 %v114, 0.0
    %v371 = vmax.f32 %v115, 0.0
    %v372 = vmax.f32 %v116, 0.0
    %v373 = vmax.f32 %v117, 0.0
    %v374 = vmax.f32 %v118, 0.0
    %v375 = vmax.f32 %v119, 0.0
    %v376 = vmax.f32 %v120, 0.0
    %v377 = vmax.f32 %v121, 0.0
    %v378 = vmax.f32 %v122, 0.0
    %v379 = vmax.f32 %v123, 0.0
    %v380 = vmax.f32 %v124, 0.0
    %v381 = vmax.f32 %v125, 0.0
    %v382 = vmax.f32 %v126, 0.0
    %v383 = vmax.f32 %v127, 0.0
    %v384 = vmax.f32 %v128, 0.0
    %v385 = vmax.f32 %v129, 0.0
    %v386 = vmax.f32 %v130, 0.0
    %v387 = vmax.f32 %v131, 0.0
    %v388 = vmax.f32 %v132, 0.0
    %v389 = vmax.f32 %v133, 0.0
    %v390 = vmax.f32 %v134, 0.0
    %v391 = vmax.f32 %v135, 0.0
    %v392 = vmax.f32 %v136, 0.0
    %v393 = vmax.f32 %v137, 0.0
    %v394 = vmax.f32 %v138, 0.0
    %v395 = vmax.f32 %v139, 0.0
    %v396 = vmax.f32 %v140, 0.0
    %v397 = vmax.f32 %v141, 0.0
    %v398 = vmax.f32 %v142, 0.0
    %v399 = vmax.f32 %v143, 0.0
    %v400 = vmax.f32 %v144, 0.0
    %v401 = vmax.f32 %v145, 0.0
    %v402 = vmax.f32 %v146, 0.0
    %v403 = vmax.f32 %v147, 0.0
    %v404 = vmax.f32 %v148, 0.0
    %v405 = vmax.f32 %v149, 0.0
    %v406 = vmax.f32 %v150, 0.0
    %v407 = vmax.f32 %v151, 0.0
    %v408 = vmax.f32 %v152, 0.0
    %v409 = vmax.f32 %v153, 0.0
    %v410 = vmax.f32 %v154, 0.0
    %v411 = vmax.f32 %v155, 0.0
    %v412 = vmax.f32 %v156, 0.0
    %v413 = vmax.f32 %v157, 0.0
    %v414 = vmax.f32 %v158, 0.0
    %v415 = vmax.f32 %v159, 0.0
    %v416 = vmax.f32 %v160, 0.0
    %v417 = vmax.f32 %v161, 0.0
    %v418 = vmax.f32 %v162, 0.0
    %v419 = vmax.f32 %v163, 0.0
    %v420 = vmax.f32 %v164, 0.0
    %v421 = vmax.f32 %v165, 0.0
    %v422 = vmax.f32 %v166, 0.0
    %v423 = vmax.f32 %v167, 0.0
    %v424 = vmax.f32 %v168, 0.0
    %v425 = vmax.f32 %v169, 0.0
    %v426 = vmax.f32 %v170, 0.0
    %v427 = vmax.f32 %v171, 0.0
    %v428 = vmax.f32 %v172, 0.0
    %v429 = vmax.f32 %v173, 0.0
    %v430 = vmax.f32 %v174, 0.0
    %v431 = vmax.f32 %v175, 0.0
    %v432 = vmax.f32 %v176, 0.0
    %v433 = vmax.f32 %v177, 0.0
    %v434 = vmax.f32 %v178, 0.0
    %v435 = vmax.f32 %v179, 0.0
    %v436 = vmax.f32 %v180, 0.0
    %v437 = vmax.f32 %v181, 0.0
    %v438 = vmax.f32 %v182, 0.0
    %v439 = vmax.f32 %v183, 0.0
    %v440 = vmax.f32 %v184, 0.0
    %v441 = vmax.f32 %v185, 0.0
    %v442 = vmax.f32 %v186, 0.0
    %v443 = vmax.f32 %v187, 0.0
    %v444 = vmax.f32 %v188, 0.0
    %v445 = vmax.f32 %v189, 0.0
    %v446 = vmax.f32 %v190, 0.0
    %v447 = vmax.f32 %v191, 0.0
    %v448 = vmax.f32 %v192, 0.0
    %v449 = vmax.f32 %v193, 0.0
    %v450 = vmax.f32 %v194, 0.0
    %v451 = vmax.f32 %v195, 0.0
    %v452 = vmax.f32 %v196, 0.0
    %v453 = vmax.f32 %v197, 0.0
    %v454 = vmax.f32 %v198, 0.0
    %v455 = vmax.f32 %v199, 0.0
    %v456 = vmax.f32 %v200, 0.0
    %v457 = vmax.f32 %v201, 0.0
    %v458 = vmax.f32 %v202, 0.0
    %v459 = vmax.f32 %v203, 0.0
    %v460 = vmax.f32 %v204, 0.0
    %v461 = vmax.f32 %v205, 0.0
    %v462 = vmax.f32 %v206, 0.0
    %v463 = vmax.f32 %v207, 0.0
    %v464 = vmax.f32 %v208, 0.0
    %v465 = vmax.f32 %v209, 0.0
    %v466 = vmax.f32 %v210, 0.0
    %v467 = vmax.f32 %v211, 0.0
    %v468 = vmax.f32 %v212, 0.0
    %v469 = vmax.f32 %v213, 0.0
    %v470 = vmax.f32 %v214, 0.0
    %v471 = vmax.f32 %v215, 0.0
    %v472 = vmax.f32 %v216, 0.0
    %v473 = vmax.f32 %v217, 0.0
    %v474 = vmax.f32 %v218, 0.0
    %v475 = vmax.f32 %v219, 0.0
    %v476 = vmax.f32 %v220, 0.0
    %v477 = vmax.f32 %v221, 0.0
    %v478 = vmax.f32 %v222, 0.0
    %v479 = vmax.f32 %v223, 0.0
    %v480 = vmax.f32 %v224, 0.0
    %v481 = vmax.f32 %v225, 0.0
    %v482 = vmax.f32 %v226, 0.0
    %v483 = vmax.f32 %v227, 0.0
    %v484 = vmax.f32 %v228, 0.0
    %v485 = vmax.f32 %v229, 0.0
    %v486 = vmax.f32 %v230, 0.0
    %v487 = vmax.f32 %v231, 0.0
    %v488 = vmax.f32 %v232, 0.0
    %v489 = vmax.f32 %v233, 0.0
    %v490 = vmax.f32 %v234, 0.0
    %v491 = vmax.f32 %v235, 0.0
    %v492 = vmax.f32 %v236, 0.0
    %v493 = vmax.f32 %v237, 0.0
    %v494 = vmax.f32 %v238, 0.0
    %v495 = vmax.f32 %v239, 0.0
    %v496 = vmax.f32 %v240, 0.0
    %v497 = vmax.f32 %v241, 0.0
    %v498 = vmax.f32 %v242, 0.0
    %v499 = vmax.f32 %v243, 0.0
    %v500 = vmax.f32 %v244, 0.0
    %v501 = vmax.f32 %v245, 0.0
    %v502 = vmax.f32 %v246, 0.0
    %v503 = vmax.f32 %v247, 0.0
    %v504 = vmax.f32 %v248, 0.0
    %v505 = vmax.f32 %v249, 0.0
    %v506 = vmax.f32 %v250, 0.0
    %v507 = vmax.f32 %v251, 0.0
    %v508 = vmax.f32 %v252, 0.0
    %v509 = vmax.f32 %v253, 0.0
    %v510 = vmax.f32 %v254, 0.0
    %v511 = vmax.f32 %v255, 0.0
    %v512 = vmax.f32 %v256, 0.0
    %v513 = vmax.f32 %v257, 0.0
    %v514 = vmax.f32 %v258, 0.0
    %v515 = vmax.f32 %v259, 0.0
    %v516 = vmax.f32 %v260, 0.0
    %v517 = vmax.f32 %v261, 0.0
    %v518 = vmax.f32 %v262, 0.0
    %v519 = vmax.f32 %v263, 0.0
    %v520 = vmax.f32 %v264, 0.0
    %v521 = vmax.f32 %v265, 0.0
    %v522 = vmax.f32 %v266, 0.0
    %v523 = vmax.f32 %v267, 0.0
    %v524 = vmax.f32 %v268, 0.0
    %v525 = vmax.f32 %v269, 0.0
    %v526 = vmax.f32 %v270, 0.0
    %v527 = vmax.f32 %v271, 0.0
    %v528 = vmax.f32 %v272, 0.0
    %v529 = vmax.f32 %v273, 0.0
    %v530 = vmax.f32 %v274, 0.0
    %v531 = vmax.f32 %v275, 0.0
    %v532 = vmax.f32 %v276, 0.0
    %v533 = vmax.f32 %v277, 0.0
    %v534 = vmax.f32 %v278, 0.0
    %535 = vst [vmem:[#allocation5] sm:$0xff] %v279
    %536 = vst [vmem:[#allocation5 + $0x8] sm:$0xff] %v280
    %537 = vst [vmem:[#allocation5 + $0x10] sm:$0xff] %v281
    %538 = vst [vmem:[#allocation5 + $0x18] sm:$0xff] %v282
    %539 = vst [vmem:[#allocation5 + $0x20] sm:$0xff] %v283
    %540 = vst [vmem:[#allocation5 + $0x28] sm:$0xff] %v284
    %541 = vst [vmem:[#allocation5 + $0x30] sm:$0xff] %v285
    %542 = vst [vmem:[#allocation5 + $0x38] sm:$0xff] %v286
    %543 = vst [vmem:[#allocation5 + $0x40] sm:$0xff] %v287
    %544 = vst [vmem:[#allocation5 + $0x48] sm:$0xff] %v288
    %545 = vst [vmem:[#allocation5 + $0x50] sm:$0xff] %v289
    %546 = vst [vmem:[#allocation5 + $0x58] sm:$0xff] %v290
    %547 = vst [vmem:[#allocation5 + $0x60] sm:$0xff] %v291
    %548 = vst [vmem:[#allocation5 + $0x68] sm:$0xff] %v292
    %549 = vst [vmem:[#allocation5 + $0x70] sm:$0xff] %v293
    %550 = vst [vmem:[#allocation5 + $0x78] sm:$0xff] %v294
    %551 = vst [vmem:[#allocation5 + $0x80] sm:$0xff] %v295
    %552 = vst [vmem:[#allocation5 + $0x88] sm:$0xff] %v296
    %553 = vst [vmem:[#allocation5 + $0x90] sm:$0xff] %v297
    %554 = vst [vmem:[#allocation5 + $0x98] sm:$0xff] %v298
    %555 = vst [vmem:[#allocation5 + $0xa0] sm:$0xff] %v299
    %556 = vst [vmem:[#allocation5 + $0xa8] sm:$0xff] %v300
    %557 = vst [vmem:[#allocation5 + $0xb0] sm:$0xff] %v301
    %558 = vst [vmem:[#allocation5 + $0xb8] sm:$0xff] %v302
    %559 = vst [vmem:[#allocation5 + $0xc0] sm:$0xff] %v303
    %560 = vst [vmem:[#allocation5 + $0xc8] sm:$0xff] %v304
    %561 = vst [vmem:[#allocation5 + $0xd0] sm:$0xff] %v305
    %562 = vst [vmem:[#allocation5 + $0xd8] sm:$0xff] %v306
    %563 = vst [vmem:[#allocation5 + $0xe0] sm:$0xff] %v307
    %564 = vst [vmem:[#allocation5 + $0xe8] sm:$0xff] %v308
    %565 = vst [vmem:[#allocation5 + $0xf0] sm:$0xff] %v309
    %566 = vst [vmem:[#allocation5 + $0xf8] sm:$0xff] %v310
    %567 = vst [vmem:[#allocation5 + $0x100] sm:$0xff] %v311
    %568 = vst [vmem:[#allocation5 + $0x108] sm:$0xff] %v312
    %569 = vst [vmem:[#allocation5 + $0x110] sm:$0xff] %v313
    %570 = vst [vmem:[#allocation5 + $0x118] sm:$0xff] %v314
    %571 = vst [vmem:[#allocation5 + $0x120] sm:$0xff] %v315
    %572 = vst [vmem:[#allocation5 + $0x128] sm:$0xff] %v316
    %573 = vst [vmem:[#allocation5 + $0x130] sm:$0xff] %v317
    %574 = vst [vmem:[#allocation5 + $0x138] sm:$0xff] %v318
    %575 = vst [vmem:[#allocation5 + $0x140] sm:$0xff] %v319
    %576 = vst [vmem:[#allocation5 + $0x148] sm:$0xff] %v320
    %577 = vst [vmem:[#allocation5 + $0x150] sm:$0xff] %v321
    %578 = vst [vmem:[#allocation5 + $0x158] sm:$0xff] %v322
    %579 = vst [vmem:[#allocation5 + $0x160] sm:$0xff] %v323
    %580 = vst [vmem:[#allocation5 + $0x168] sm:$0xff] %v324
    %581 = vst [vmem:[#allocation5 + $0x170] sm:$0xff] %v325
    %582 = vst [vmem:[#allocation5 + $0x178] sm:$0xff] %v326
    %583 = vst [vmem:[#allocation5 + $0x180] sm:$0xff] %v327
    %584 = vst [vmem:[#allocation5 + $0x188] sm:$0xff] %v328
    %585 = vst [vmem:[#allocation5 + $0x190] sm:$0xff] %v329
    %586 = vst [vmem:[#allocation5 + $0x198] sm:$0xff] %v330
    %587 = vst [vmem:[#allocation5 + $0x1a0] sm:$0xff] %v331
    %588 = vst [vmem:[#allocation5 + $0x1a8] sm:$0xff] %v332
    %589 = vst [vmem:[#allocation5 + $0x1b0] sm:$0xff] %v333
    %590 = vst [vmem:[#allocation5 + $0x1b8] sm:$0xff] %v334
    %591 = vst [vmem:[#allocation5 + $0x1c0] sm:$0xff] %v335
    %592 = vst [vmem:[#allocation5 + $0x1c8] sm:$0xff] %v336
    %593 = vst [vmem:[#allocation5 + $0x1d0] sm:$0xff] %v337
    %594 = vst [vmem:[#allocation5 + $0x1d8] sm:$0xff] %v338
    %595 = vst [vmem:[#allocation5 + $0x1e0] sm:$0xff] %v339
    %596 = vst [vmem:[#allocation5 + $0x1e8] sm:$0xff] %v340
    %597 = vst [vmem:[#allocation5 + $0x1f0] sm:$0xff] %v341
    %598 = vst [vmem:[#allocation5 + $0x1f8] sm:$0xff] %v342
    %599 = vst [vmem:[#allocation5 + $0x200] sm:$0xff] %v343
    %600 = vst [vmem:[#allocation5 + $0x208] sm:$0xff] %v344
    %601 = vst [vmem:[#allocation5 + $0x210] sm:$0xff] %v345
    %602 = vst [vmem:[#allocation5 + $0x218] sm:$0xff] %v346
    %603 = vst [vmem:[#allocation5 + $0x220] sm:$0xff] %v347
    %604 = vst [vmem:[#allocation5 + $0x228] sm:$0xff] %v348
    %605 = vst [vmem:[#allocation5 + $0x230] sm:$0xff] %v349
    %606 = vst [vmem:[#allocation5 + $0x238] sm:$0xff] %v350
    %607 = vst [vmem:[#allocation5 + $0x240] sm:$0xff] %v351
    %608 = vst [vmem:[#allocation5 + $0x248] sm:$0xff] %v352
    %609 = vst [vmem:[#allocation5 + $0x250] sm:$0xff] %v353
    %610 = vst [vmem:[#allocation5 + $0x258] sm:$0xff] %v354
    %611 = vst [vmem:[#allocation5 + $0x260] sm:$0xff] %v355
    %612 = vst [vmem:[#allocation5 + $0x268] sm:$0xff] %v356
    %613 = vst [vmem:[#allocation5 + $0x270] sm:$0xff] %v357
    %614 = vst [vmem:[#allocation5 + $0x278] sm:$0xff] %v358
    %615 = vst [vmem:[#allocation5 + $0x280] sm:$0xff] %v359
    %616 = vst [vmem:[#allocation5 + $0x288] sm:$0xff] %v360
    %617 = vst [vmem:[#allocation5 + $0x290] sm:$0xff] %v361
    %618 = vst [vmem:[#allocation5 + $0x298] sm:$0xff] %v362
    %619 = vst [vmem:[#allocation5 + $0x2a0] sm:$0xff] %v363
    %620 = vst [vmem:[#allocation5 + $0x2a8] sm:$0xff] %v364
    %621 = vst [vmem:[#allocation5 + $0x2b0] sm:$0xff] %v365
    %622 = vst [vmem:[#allocation5 + $0x2b8] sm:$0xff] %v366
    %623 = vst [vmem:[#allocation5 + $0x2c0] sm:$0xff] %v367
    %624 = vst [vmem:[#allocation5 + $0x2c8] sm:$0xff] %v368
    %625 = vst [vmem:[#allocation5 + $0x2d0] sm:$0xff] %v369
    %626 = vst [vmem:[#allocation5 + $0x2d8] sm:$0xff] %v370
    %627 = vst [vmem:[#allocation5 + $0x2e0] sm:$0xff] %v371
    %628 = vst [vmem:[#allocation5 + $0x2e8] sm:$0xff] %v372
    %629 = vst [vmem:[#allocation5 + $0x2f0] sm:$0xff] %v373
    %630 = vst [vmem:[#allocation5 + $0x2f8] sm:$0xff] %v374
    %631 = vst [vmem:[#allocation5 + $0x300] sm:$0xff] %v375
    %632 = vst [vmem:[#allocation5 + $0x308] sm:$0xff] %v376
    %633 = vst [vmem:[#allocation5 + $0x310] sm:$0xff] %v377
    %634 = vst [vmem:[#allocation5 + $0x318] sm:$0xff] %v378
    %635 = vst [vmem:[#allocation5 + $0x320] sm:$0xff] %v379
    %636 = vst [vmem:[#allocation5 + $0x328] sm:$0xff] %v380
    %637 = vst [vmem:[#allocation5 + $0x330] sm:$0xff] %v381
    %638 = vst [vmem:[#allocation5 + $0x338] sm:$0xff] %v382
    %639 = vst [vmem:[#allocation5 + $0x340] sm:$0xff] %v383
    %640 = vst [vmem:[#allocation5 + $0x348] sm:$0xff] %v384
    %641 = vst [vmem:[#allocation5 + $0x350] sm:$0xff] %v385
    %642 = vst [vmem:[#allocation5 + $0x358] sm:$0xff] %v386
    %643 = vst [vmem:[#allocation5 + $0x360] sm:$0xff] %v387
    %644 = vst [vmem:[#allocation5 + $0x368] sm:$0xff] %v388
    %645 = vst [vmem:[#allocation5 + $0x370] sm:$0xff] %v389
    %646 = vst [vmem:[#allocation5 + $0x378] sm:$0xff] %v390
    %647 = vst [vmem:[#allocation5 + $0x380] sm:$0xff] %v391
    %648 = vst [vmem:[#allocation5 + $0x388] sm:$0xff] %v392
    %649 = vst [vmem:[#allocation5 + $0x390] sm:$0xff] %v393
    %650 = vst [vmem:[#allocation5 + $0x398] sm:$0xff] %v394
    %651 = vst [vmem:[#allocation5 + $0x3a0] sm:$0xff] %v395
    %652 = vst [vmem:[#allocation5 + $0x3a8] sm:$0xff] %v396
    %653 = vst [vmem:[#allocation5 + $0x3b0] sm:$0xff] %v397
    %654 = vst [vmem:[#allocation5 + $0x3b8] sm:$0xff] %v398
    %655 = vst [vmem:[#allocation5 + $0x3c0] sm:$0xff] %v399
    %656 = vst [vmem:[#allocation5 + $0x3c8] sm:$0xff] %v400
    %657 = vst [vmem:[#allocation5 + $0x3d0] sm:$0xff] %v401
    %658 = vst [vmem:[#allocation5 + $0x3d8] sm:$0xff] %v402
    %659 = vst [vmem:[#allocation5 + $0x3e0] sm:$0xff] %v403
    %660 = vst [vmem:[#allocation5 + $0x3e8] sm:$0xff] %v404
    %661 = vst [vmem:[#allocation5 + $0x3f0] sm:$0xff] %v405
    %662 = vst [vmem:[#allocation5 + $0x3f8] sm:$0xff] %v406
    %663 = vst [vmem:[#allocation5 + $0x400] sm:$0xff] %v407
    %664 = vst [vmem:[#allocation5 + $0x408] sm:$0xff] %v408
    %665 = vst [vmem:[#allocation5 + $0x410] sm:$0xff] %v409
    %666 = vst [vmem:[#allocation5 + $0x418] sm:$0xff] %v410
    %667 = vst [vmem:[#allocation5 + $0x420] sm:$0xff] %v411
    %668 = vst [vmem:[#allocation5 + $0x428] sm:$0xff] %v412
    %669 = vst [vmem:[#allocation5 + $0x430] sm:$0xff] %v413
    %670 = vst [vmem:[#allocation5 + $0x438] sm:$0xff] %v414
    %671 = vst [vmem:[#allocation5 + $0x440] sm:$0xff] %v415
    %672 = vst [vmem:[#allocation5 + $0x448] sm:$0xff] %v416
    %673 = vst [vmem:[#allocation5 + $0x450] sm:$0xff] %v417
    %674 = vst [vmem:[#allocation5 + $0x458] sm:$0xff] %v418
    %675 = vst [vmem:[#allocation5 + $0x460] sm:$0xff] %v419
    %676 = vst [vmem:[#allocation5 + $0x468] sm:$0xff] %v420
    %677 = vst [vmem:[#allocation5 + $0x470] sm:$0xff] %v421
    %678 = vst [vmem:[#allocation5 + $0x478] sm:$0xff] %v422
    %679 = vst [vmem:[#allocation5 + $0x480] sm:$0xff] %v423
    %680 = vst [vmem:[#allocation5 + $0x488] sm:$0xff] %v424
    %681 = vst [vmem:[#allocation5 + $0x490] sm:$0xff] %v425
    %682 = vst [vmem:[#allocation5 + $0x498] sm:$0xff] %v426
    %683 = vst [vmem:[#allocation5 + $0x4a0] sm:$0xff] %v427
    %684 = vst [vmem:[#allocation5 + $0x4a8] sm:$0xff] %v428
    %685 = vst [vmem:[#allocation5 + $0x4b0] sm:$0xff] %v429
    %686 = vst [vmem:[#allocation5 + $0x4b8] sm:$0xff] %v430
    %687 = vst [vmem:[#allocation5 + $0x4c0] sm:$0xff] %v431
    %688 = vst [vmem:[#allocation5 + $0x4c8] sm:$0xff] %v432
    %689 = vst [vmem:[#allocation5 + $0x4d0] sm:$0xff] %v433
    %690 = vst [vmem:[#allocation5 + $0x4d8] sm:$0xff] %v434
    %691 = vst [vmem:[#allocation5 + $0x4e0] sm:$0xff] %v435
    %692 = vst [vmem:[#allocation5 + $0x4e8] sm:$0xff] %v436
    %693 = vst [vmem:[#allocation5 + $0x4f0] sm:$0xff] %v437
    %694 = vst [vmem:[#allocation5 + $0x4f8] sm:$0xff] %v438
    %695 = vst [vmem:[#allocation5 + $0x500] sm:$0xff] %v439
    %696 = vst [vmem:[#allocation5 + $0x508] sm:$0xff] %v440
    %697 = vst [vmem:[#allocation5 + $0x510] sm:$0xff] %v441
    %698 = vst [vmem:[#allocation5 + $0x518] sm:$0xff] %v442
    %699 = vst [vmem:[#allocation5 + $0x520] sm:$0xff] %v443
    %700 = vst [vmem:[#allocation5 + $0x528] sm:$0xff] %v444
    %701 = vst [vmem:[#allocation5 + $0x530] sm:$0xff] %v445
    %702 = vst [vmem:[#allocation5 + $0x538] sm:$0xff] %v446
    %703 = vst [vmem:[#allocation5 + $0x540] sm:$0xff] %v447
    %704 = vst [vmem:[#allocation5 + $0x548] sm:$0xff] %v448
    %705 = vst [vmem:[#allocation5 + $0x550] sm:$0xff] %v449
    %706 = vst [vmem:[#allocation5 + $0x558] sm:$0xff] %v450
    %707 = vst [vmem:[#allocation5 + $0x560] sm:$0xff] %v451
    %708 = vst [vmem:[#allocation5 + $0x568] sm:$0xff] %v452
    %709 = vst [vmem:[#allocation5 + $0x570] sm:$0xff] %v453
    %710 = vst [vmem:[#allocation5 + $0x578] sm:$0xff] %v454
    %711 = vst [vmem:[#allocation5 + $0x580] sm:$0xff] %v455
    %712 = vst [vmem:[#allocation5 + $0x588] sm:$0xff] %v456
    %713 = vst [vmem:[#allocation5 + $0x590] sm:$0xff] %v457
    %714 = vst [vmem:[#allocation5 + $0x598] sm:$0xff] %v458
    %715 = vst [vmem:[#allocation5 + $0x5a0] sm:$0xff] %v459
    %716 = vst [vmem:[#allocation5 + $0x5a8] sm:$0xff] %v460
    %717 = vst [vmem:[#allocation5 + $0x5b0] sm:$0xff] %v461
    %718 = vst [vmem:[#allocation5 + $0x5b8] sm:$0xff] %v462
    %719 = vst [vmem:[#allocation5 + $0x5c0] sm:$0xff] %v463
    %720 = vst [vmem:[#allocation5 + $0x5c8] sm:$0xff] %v464
    %721 = vst [vmem:[#allocation5 + $0x5d0] sm:$0xff] %v465
    %722 = vst [vmem:[#allocation5 + $0x5d8] sm:$0xff] %v466
    %723 = vst [vmem:[#allocation5 + $0x5e0] sm:$0xff] %v467
    %724 = vst [vmem:[#allocation5 + $0x5e8] sm:$0xff] %v468
    %725 = vst [vmem:[#allocation5 + $0x5f0] sm:$0xff] %v469
    %726 = vst [vmem:[#allocation5 + $0x5f8] sm:$0xff] %v470
    %727 = vst [vmem:[#allocation5 + $0x600] sm:$0xff] %v471
    %728 = vst [vmem:[#allocation5 + $0x608] sm:$0xff] %v472
    %729 = vst [vmem:[#allocation5 + $0x610] sm:$0xff] %v473
    %730 = vst [vmem:[#allocation5 + $0x618] sm:$0xff] %v474
    %731 = vst [vmem:[#allocation5 + $0x620] sm:$0xff] %v475
    %732 = vst [vmem:[#allocation5 + $0x628] sm:$0xff] %v476
    %733 = vst [vmem:[#allocation5 + $0x630] sm:$0xff] %v477
    %734 = vst [vmem:[#allocation5 + $0x638] sm:$0xff] %v478
    %735 = vst [vmem:[#allocation5 + $0x640] sm:$0xff] %v479
    %736 = vst [vmem:[#allocation5 + $0x648] sm:$0xff] %v480
    %737 = vst [vmem:[#allocation5 + $0x650] sm:$0xff] %v481
    %738 = vst [vmem:[#allocation5 + $0x658] sm:$0xff] %v482
    %739 = vst [vmem:[#allocation5 + $0x660] sm:$0xff] %v483
    %740 = vst [vmem:[#allocation5 + $0x668] sm:$0xff] %v484
    %741 = vst [vmem:[#allocation5 + $0x670] sm:$0xff] %v485
    %742 = vst [vmem:[#allocation5 + $0x678] sm:$0xff] %v486
    %743 = vst [vmem:[#allocation5 + $0x680] sm:$0xff] %v487
    %744 = vst [vmem:[#allocation5 + $0x688] sm:$0xff] %v488
    %745 = vst [vmem:[#allocation5 + $0x690] sm:$0xff] %v489
    %746 = vst [vmem:[#allocation5 + $0x698] sm:$0xff] %v490
    %747 = vst [vmem:[#allocation5 + $0x6a0] sm:$0xff] %v491
    %748 = vst [vmem:[#allocation5 + $0x6a8] sm:$0xff] %v492
    %749 = vst [vmem:[#allocation5 + $0x6b0] sm:$0xff] %v493
    %750 = vst [vmem:[#allocation5 + $0x6b8] sm:$0xff] %v494
    %751 = vst [vmem:[#allocation5 + $0x6c0] sm:$0xff] %v495
    %752 = vst [vmem:[#allocation5 + $0x6c8] sm:$0xff] %v496
    %753 = vst [vmem:[#allocation5 + $0x6d0] sm:$0xff] %v497
    %754 = vst [vmem:[#allocation5 + $0x6d8] sm:$0xff] %v498
    %755 = vst [vmem:[#allocation5 + $0x6e0] sm:$0xff] %v499
    %756 = vst [vmem:[#allocation5 + $0x6e8] sm:$0xff] %v500
    %757 = vst [vmem:[#allocation5 + $0x6f0] sm:$0xff] %v501
    %758 = vst [vmem:[#allocation5 + $0x6f8] sm:$0xff] %v502
    %759 = vst [vmem:[#allocation5 + $0x700] sm:$0xff] %v503
    %760 = vst [vmem:[#allocation5 + $0x708] sm:$0xff] %v504
    %761 = vst [vmem:[#allocation5 + $0x710] sm:$0xff] %v505
    %762 = vst [vmem:[#allocation5 + $0x718] sm:$0xff] %v506
    %763 = vst [vmem:[#allocation5 + $0x720] sm:$0xff] %v507
    %764 = vst [vmem:[#allocation5 + $0x728] sm:$0xff] %v508
    %765 = vst [vmem:[#allocation5 + $0x730] sm:$0xff] %v509
    %766 = vst [vmem:[#allocation5 + $0x738] sm:$0xff] %v510
    %767 = vst [vmem:[#allocation5 + $0x740] sm:$0xff] %v511
    %768 = vst [vmem:[#allocation5 + $0x748] sm:$0xff] %v512
    %769 = vst [vmem:[#allocation5 + $0x750] sm:$0xff] %v513
    %770 = vst [vmem:[#allocation5 + $0x758] sm:$0xff] %v514
    %771 = vst [vmem:[#allocation5 + $0x760] sm:$0xff] %v515
    %772 = vst [vmem:[#allocation5 + $0x768] sm:$0xff] %v516
    %773 = vst [vmem:[#allocation5 + $0x770] sm:$0xff] %v517
    %774 = vst [vmem:[#allocation5 + $0x778] sm:$0xff] %v518
    %775 = vst [vmem:[#allocation5 + $0x780] sm:$0xff] %v519
    %776 = vst [vmem:[#allocation5 + $0x788] sm:$0xff] %v520
    %777 = vst [vmem:[#allocation5 + $0x790] sm:$0xff] %v521
    %778 = vst [vmem:[#allocation5 + $0x798] sm:$0xff] %v522
    %779 = vst [vmem:[#allocation5 + $0x7a0] sm:$0xff] %v523
    %780 = vst [vmem:[#allocation5 + $0x7a8] sm:$0xff] %v524
    %781 = vst [vmem:[#allocation5 + $0x7b0] sm:$0xff] %v525
    %782 = vst [vmem:[#allocation5 + $0x7b8] sm:$0xff] %v526
    %783 = vst [vmem:[#allocation5 + $0x7c0] sm:$0xff] %v527
    %784 = vst [vmem:[#allocation5 + $0x7c8] sm:$0xff] %v528
    %785 = vst [vmem:[#allocation5 + $0x7d0] sm:$0xff] %v529
    %786 = vst [vmem:[#allocation5 + $0x7d8] sm:$0xff] %v530
    %787 = vst [vmem:[#allocation5 + $0x7e0] sm:$0xff] %v531
    %788 = vst [vmem:[#allocation5 + $0x7e8] sm:$0xff] %v532
    %789 = vst [vmem:[#allocation5 + $0x7f0] sm:$0xff] %v533
    %790 = vst [vmem:[#allocation5 + $0x7f8] sm:$0xff] %v534
    // Predicated region
    $region10: #{tpu_custom_call.1} parent=1 // pred_check
      _
    $region11: #{tpu_custom_call.1} parent=1 // pred_check_branch
      %792 = sbr.rel (0) target = $region13
    $region12: #{tpu_custom_call.1} parent=1 // pred_region
      %s794 = ssub.s32 32768, 32768
      %795 = vsyncadd [#allocation4], %s794
      %s796 = sshll.u32 [#allocation5], 4
      %s797 = int_to_ptr.vmem [resolvable:$true] %s796
      %802 = dma.vmem_to_hbm [thread:$0]  %s797, 32768, %s1, [#allocation4], 512, 512, 32
    $region13: #{tpu_custom_call.1} parent=1 // pred_fallthru
      _
    // Predicated region
    $region14: #{tpu_custom_call.1} parent=1 // pred_check
      _
    $region15: #{tpu_custom_call.1} parent=1 // pred_check_branch
      %804 = sbr.rel (0) target = $region17
    $region16: #{tpu_custom_call.1} parent=1 // pred_region
      %805 = dma.done [#allocation4], 32768
    $region17: #{tpu_custom_call.1} parent=1 // pred_fallthru
      _
    %806 = vsyncpa [#allocation3], 1
    %807 = vsyncpa [#allocation4], 1

</llo_original>
